<compile_context>
chip_gen: v6e
topology: v6e:2x2x1
jax: 0.10.0
libtpu: 0.0.40
codegen_flags: <defaults>
</compile_context>

<pallas_src>
import functools

import numpy as np
import jax
import jax.numpy as jnp
from jax.experimental import pallas as pl
from jax.experimental.pallas import tpu as pltpu

KERNEL_SIZE = 7
STRIDE = 3
VALUE_RANGE = 1.0
K1 = 0.01
K2 = 0.03

_SUBLANE = 8
_LANE = 128


def _round_up(x, m):
    return ((x + m - 1) // m) * m


def _split3_f32(v):
    """Error-free split of an f32 array into 3 bf16-exact f32 components.

    v == hi + mid + lo exactly, with |lo| <= 2^-18 |v| and every component
    exactly representable in bf16.  Matmuls against these parts are therefore
    f32-accurate whether the MXU truncates f32 operands to bf16 or not.
    """
    hi = v.astype(jnp.bfloat16).astype(jnp.float32)
    r = v - hi
    mid = r.astype(jnp.bfloat16).astype(jnp.float32)
    lo = r - mid
    return hi, mid, lo


def _exact_dot(a, b, split):
    """f32-accurate a @ b on the MXU; `split` names the non-0/1 operand."""
    parts = _split3_f32(a if split == "lhs" else b)
    out = None
    for p in parts:
        lhs = p if split == "lhs" else a
        rhs = b if split == "lhs" else p
        term = jnp.dot(lhs, rhs, preferred_element_type=jnp.float32)
        out = term if out is None else out + term
    return out


def _dssim_kernel(x_ref, mh_ref, mw_ref, out_ref, s1_ref, sxx_ref, *,
                  n_patches):
    """Grid = (B, C): accumulate per-batch patch-offset statistics over C."""
    c = pl.program_id(1)

    @pl.when(c == 0)
    def _init():
        s1_ref[...] = jnp.zeros_like(s1_ref)
        sxx_ref[...] = jnp.zeros_like(sxx_ref)

    x = x_ref[0, 0].astype(jnp.float32)          # (Hp, Wp)
    mh = mh_ref[...]                             # (KPs, Hp)  0/1 row selection
    mw = mw_ref[...]                             # (Wp, KPl)  0/1 col selection

    # s1[ki, kj]  = sum_{t<nh, u<nw} x[ki + t*s, kj + u*s]      (this channel)
    # sxx[ki, kj] = same for x*x          -> both equal  mh @ p @ mw.
    for p, acc in ((x, s1_ref), (x * x, sxx_ref)):
        y = _exact_dot(mh, p, split="rhs")               # (KPs, Wp)
        acc[...] += _exact_dot(y, mw, split="lhs")       # (KPs, KPl)

    @pl.when(c == pl.num_programs(1) - 1)
    def _finalize():
        c1 = (K1 * VALUE_RANGE) ** 2
        c2 = (K2 * VALUE_RANGE) ** 2
        n = float(n_patches)
        inv_n = 1.0 / n
        inv_nm1 = 1.0 / float(max(n_patches - 1, 1))     # guard n == 1

        s1 = s1_ref[...]
        sxx = sxx_ref[...]
        # pt == pp in the reference module (both patch sets are built from
        # `prediction`), so uy/vy/cov collapse onto the pp statistics.
        ux = s1 * inv_n
        uy = ux
        vx = (sxx - n * ux * ux) * inv_nm1               # unbiased (torch.var)
        vy = vx
        cov = sxx * inv_n - ux * uy                      # biased, as reference

        ssim = (2.0 * ux * uy + c1) * (2.0 * cov + c2)
        # NOTE: reference squares the variances in the denominator — kept.
        dominator = (ux * ux + uy * uy + c1) * (vx * vx + vy * vy + c2)
        ssim = ssim / dominator

        # Zero-padded (ki >= k or kj >= k) slots have s1 == sxx == 0, so
        # ssim == 1 and they contribute exactly 0 to the sum.
        out_ref[0] = (1.0 - ssim) * 0.5


@functools.partial(jax.jit, static_argnames=("kernel_size", "stride"))
def dssim_loss(prediction, target, kernel_size=KERNEL_SIZE, stride=STRIDE):
    """DSSIM = mean((1 - SSIM)/2) for NCHW inputs, like the PyTorch module.

    NOTE: the reference extract_patches builds *both* patch sets from
    `prediction` (target is ignored) — reproduced exactly.
    """
    del target  # reference-module behavior
    x = prediction
    B, C, H, W = x.shape
    k, s = kernel_size, stride
    nh = (H - k) // s + 1
    nw = (W - k) // s + 1
    n_patches = C * nh * nw

    kp_s = _round_up(k, _SUBLANE)    # patch-row offsets -> sublanes
    kp_l = _round_up(k, _LANE)       # patch-col offsets -> lanes

    # Pad spatial dims to the native (8,128) tiling only when needed (no-op
    # for aligned image sizes).  The selection matrices never index padded
    # rows/cols, so the pad value is irrelevant to the result.
    hp = _round_up(H, _SUBLANE)
    wp = _round_up(W, _LANE)
    if (hp, wp) != (H, W):
        x = jnp.pad(x, ((0, 0), (0, 0), (0, hp - H), (0, wp - W)))

    # 0/1 selection matrices:  mh @ x @ mw  sums the strided subsample of x at
    # every patch offset (ki, kj) in one shot (rows/cols >= k stay zero).
    mh_np = np.zeros((kp_s, hp), np.float32)
    mw_np = np.zeros((wp, kp_l), np.float32)
    for ki in range(k):
        mh_np[ki, ki + s * np.arange(nh)] = 1.0
    for kj in range(k):
        mw_np[kj + s * np.arange(nw), kj] = 1.0
    mh = jnp.asarray(mh_np)
    mw = jnp.asarray(mw_np)

    kernel = functools.partial(_dssim_kernel, n_patches=n_patches)

    # Generation-aware scoped-VMEM budget (v7x: 64 MiB physical).
    try:
        vmem_cap = int(pltpu.get_tpu_info().vmem_capacity_bytes)
    except Exception:
        vmem_cap = 64 * 1024 * 1024
    block_bytes = hp * wp * x.dtype.itemsize
    need = 2 * block_bytes + 10 * hp * wp * 4 + 8 * kp_s * kp_l * 4 + (2 << 20)
    vmem_limit = int(min(max(need, 16 << 20), vmem_cap // 2))

    bytes_accessed = (x.size * x.dtype.itemsize + mh.size * 4 + mw.size * 4
                      + B * kp_s * kp_l * 4)
    flops = (B * C * (6 * (2 * kp_s * hp * wp + 2 * kp_s * wp * kp_l)
                      + 8 * hp * wp)
             + B * kp_s * kp_l * 16)

    out = pl.pallas_call(
        kernel,
        out_shape=jax.ShapeDtypeStruct((B, kp_s, kp_l), jnp.float32),
        grid_spec=pltpu.PrefetchScalarGridSpec(
            num_scalar_prefetch=0,
            grid=(B, C),
            in_specs=[
                pl.BlockSpec((1, 1, hp, wp), lambda b, c: (b, c, 0, 0)),
                pl.BlockSpec((kp_s, hp), lambda b, c: (0, 0)),
                pl.BlockSpec((wp, kp_l), lambda b, c: (0, 0)),
            ],
            out_specs=pl.BlockSpec((1, kp_s, kp_l), lambda b, c: (b, 0, 0)),
            scratch_shapes=[
                pltpu.VMEM((kp_s, kp_l), jnp.float32),
                pltpu.VMEM((kp_s, kp_l), jnp.float32),
            ],
        ),
        compiler_params=pltpu.CompilerParams(
            dimension_semantics=("parallel", "arbitrary"),
            vmem_limit_bytes=vmem_limit,
        ),
        cost_estimate=pl.CostEstimate(
            flops=flops, transcendentals=0, bytes_accessed=bytes_accessed),
    )(x, mh, mw)

    # Per-batch (8,128) tiles of (1-SSIM)/2 (zeros in padded slots); the mean
    # divides by the true number of patch positions B*k*k.
    return jnp.sum(out) / jnp.float32(B * k * k)


# ----------------------------- self-test reference -------------------------

def _extract_patches(x, k, s):
    """torch: x.unfold(2,k,s).unfold(3,k,s).view(B,-1,k,k).permute(0,2,3,1)."""
    B, C, H, W = x.shape
    nh = (H - k) // s + 1
    nw = (W - k) // s + 1
    rows = jnp.arange(nh)[:, None] * s + jnp.arange(k)[None, :]   # (nh, k)
    cols = jnp.arange(nw)[:, None] * s + jnp.arange(k)[None, :]   # (nw, k)
    p = x[:, :, rows, :]                          # (B, C, nh, k, W)
    p = p[:, :, :, :, cols]                       # (B, C, nh, k, nw, k)
    p = jnp.transpose(p, (0, 1, 2, 4, 3, 5))      # (B, C, nh, nw, k, k)
    p = p.reshape(B, C * nh * nw, k, k)           # (B, N, k, k)
    return jnp.transpose(p, (0, 2, 3, 1))         # (B, k, k, N)


def _dssim_ref(prediction, target, kernel_size=KERNEL_SIZE, stride=STRIDE):
    """Pure-JAX two-pass reference mirroring the PyTorch forward exactly."""
    pp = _extract_patches(prediction, kernel_size, stride)
    pt = _extract_patches(prediction, kernel_size, stride)  # reference quirk
    c1 = (K1 * VALUE_RANGE) ** 2
    c2 = (K2 * VALUE_RANGE) ** 2
    n = pp.shape[-1]
    ux = pp.mean(-1)
    uy = pt.mean(-1)
    vx = ((pp - ux[..., None]) ** 2).sum(-1) / (n - 1)
    vy = ((pt - uy[..., None]) ** 2).sum(-1) / (n - 1)
    cov = (pp * pt).mean(-1) - ux * uy
    ssim = (2 * ux * uy + c1) * (2 * cov + c2)
    dominator = (ux * ux + uy * uy + c1) * (vx * vx + vy * vy + c2)
    ssim = ssim / dominator
    return jnp.mean((1.0 - ssim) / 2.0)


if __name__ == "__main__":
    key = jax.random.PRNGKey(0)
    ka, kb = jax.random.split(key)
    # NCHW, spatial 16 -> nh = nw = (16-7)//3 + 1 = 4, N = C*nh*nw = 64
    prediction = jax.random.uniform(ka, (2, 4, 16, 16), dtype=jnp.float32)
    target = jax.random.uniform(kb, (2, 4, 16, 16), dtype=jnp.float32)

    loss = dssim_loss(prediction, target)
    jax.block_until_ready(loss)

    ref = _dssim_ref(prediction, target)
    assert jnp.allclose(loss, ref, rtol=5e-4, atol=1e-6), (loss, ref)

    print("KERNEL_OK")
</pallas_src>

<mosaic_0001>
module attributes {stable_mosaic.version = 11 : i64} {
  func.func @_dssim_kernel(%arg0: i32, %arg1: i32, %arg2: memref<1x1x16x128xf32, #tpu.memory_space<vmem>>, %arg3: memref<8x16xf32, #tpu.memory_space<vmem>>, %arg4: memref<128x128xf32, #tpu.memory_space<vmem>>, %arg5: memref<1x8x128xf32, #tpu.memory_space<vmem>>, %arg6: memref<8x128xf32, #tpu.memory_space<vmem>>, %arg7: memref<8x128xf32, #tpu.memory_space<vmem>>) attributes {dimension_semantics = [#tpu.dimension_semantics<parallel>, #tpu.dimension_semantics<arbitrary>], iteration_bounds = array<i64: 2, 4>, scalar_prefetch = 0 : i64, scratch_operands = 2 : i64, tpu.core_type = #tpu.core_type<tc>, window_params = [{transform_indices = @transform_0, window_bounds = array<i64: 1, 1, 16, 128>}, {pipeline_mode = #tpu.pipeline_mode<synchronous>, transform_indices = @transform_1, window_bounds = array<i64: 8, 16>}, {pipeline_mode = #tpu.pipeline_mode<synchronous>, transform_indices = @transform_2, window_bounds = array<i64: 128, 128>}, {transform_indices = @transform_3, window_bounds = array<i64: 1, 8, 128>}]} {
    %c0_i32 = arith.constant 0 : i32
    %0 = arith.cmpi eq, %arg1, %c0_i32 : i32
    %1 = arith.extui %0 : i1 to i32
    %c0_i32_0 = arith.constant 0 : i32
    %2 = arith.cmpi ne, %1, %c0_i32_0 : i32
    scf.if %2 {
      %cst_28 = arith.constant 0.000000e+00 : f32
      %61 = vector.broadcast %cst_28 : f32 to vector<8x128xf32>
      %c0_29 = arith.constant 0 : index
      %c0_30 = arith.constant 0 : index
      %62 = vector.load %arg6[%c0_29, %c0_30] : memref<8x128xf32, #tpu.memory_space<vmem>>, vector<8x128xf32>
      tpu.vector_store %arg6[%c0_29, %c0_30], %61 {strides = array<i32>} : memref<8x128xf32, #tpu.memory_space<vmem>>, vector<8x128xf32>,
      %cst_31 = arith.constant 0.000000e+00 : f32
      %63 = vector.broadcast %cst_31 : f32 to vector<8x128xf32>
      %c0_32 = arith.constant 0 : index
      %c0_33 = arith.constant 0 : index
      %64 = vector.load %arg7[%c0_32, %c0_33] : memref<8x128xf32, #tpu.memory_space<vmem>>, vector<8x128xf32>
      tpu.vector_store %arg7[%c0_32, %c0_33], %63 {strides = array<i32>} : memref<8x128xf32, #tpu.memory_space<vmem>>, vector<8x128xf32>,
    } else {
    }
    %c0 = arith.constant 0 : index
    %c0_1 = arith.constant 0 : index
    %c0_2 = arith.constant 0 : index
    %c0_3 = arith.constant 0 : index
    %3 = vector.load %arg2[%c0, %c0_1, %c0_2, %c0_3] : memref<1x1x16x128xf32, #tpu.memory_space<vmem>>, vector<1x1x16x128xf32>
    %4 = vector.shape_cast %3 : vector<1x1x16x128xf32> to vector<16x128xf32>
    %c0_4 = arith.constant 0 : index
    %c0_5 = arith.constant 0 : index
    %5 = vector.load %arg3[%c0_4, %c0_5] : memref<8x16xf32, #tpu.memory_space<vmem>>, vector<8x16xf32>
    %c0_6 = arith.constant 0 : index
    %c0_7 = arith.constant 0 : index
    %6 = vector.load %arg4[%c0_6, %c0_7] : memref<128x128xf32, #tpu.memory_space<vmem>>, vector<128x128xf32>
    %7 = arith.mulf %4, %4 : vector<16x128xf32>
    %8 = arith.truncf %4 : vector<16x128xf32> to vector<16x128xbf16>
    %9 = arith.extf %8 : vector<16x128xbf16> to vector<16x128xf32>
    %10 = arith.subf %4, %9 : vector<16x128xf32>
    %11 = arith.truncf %10 : vector<16x128xf32> to vector<16x128xbf16>
    %12 = arith.extf %11 : vector<16x128xbf16> to vector<16x128xf32>
    %13 = arith.subf %10, %12 : vector<16x128xf32>
    %cst = arith.constant dense<0.000000e+00> : vector<8x128xf32>
    %14 = tpu.matmul %5, %9, %cst {dimension_numbers = #tpu.dot_dimension_numbers<[1], [0], [0], [1], [0, 0, 1, 1], [], []>} : vector<8x16xf32>, vector<16x128xf32>, vector<8x128xf32> -> vector<8x128xf32>
    %cst_8 = arith.constant dense<0.000000e+00> : vector<8x128xf32>
    %15 = tpu.matmul %5, %12, %cst_8 {dimension_numbers = #tpu.dot_dimension_numbers<[1], [0], [0], [1], [0, 0, 1, 1], [], []>} : vector<8x16xf32>, vector<16x128xf32>, vector<8x128xf32> -> vector<8x128xf32>
    %16 = arith.addf %14, %15 : vector<8x128xf32>
    %cst_9 = arith.constant dense<0.000000e+00> : vector<8x128xf32>
    %17 = tpu.matmul %5, %13, %cst_9 {dimension_numbers = #tpu.dot_dimension_numbers<[1], [0], [0], [1], [0, 0, 1, 1], [], []>} : vector<8x16xf32>, vector<16x128xf32>, vector<8x128xf32> -> vector<8x128xf32>
    %18 = arith.addf %16, %17 : vector<8x128xf32>
    %c0_10 = arith.constant 0 : index
    %c0_11 = arith.constant 0 : index
    %19 = vector.load %arg6[%c0_10, %c0_11] : memref<8x128xf32, #tpu.memory_space<vmem>>, vector<8x128xf32>
    %20 = arith.truncf %18 : vector<8x128xf32> to vector<8x128xbf16>
    %21 = arith.extf %20 : vector<8x128xbf16> to vector<8x128xf32>
    %22 = arith.subf %18, %21 : vector<8x128xf32>
    %23 = arith.truncf %22 : vector<8x128xf32> to vector<8x128xbf16>
    %24 = arith.extf %23 : vector<8x128xbf16> to vector<8x128xf32>
    %25 = arith.subf %22, %24 : vector<8x128xf32>
    %cst_12 = arith.constant dense<0.000000e+00> : vector<8x128xf32>
    %26 = tpu.matmul %21, %6, %cst_12 {dimension_numbers = #tpu.dot_dimension_numbers<[1], [0], [0], [1], [0, 0, 1, 1], [], []>} : vector<8x128xf32>, vector<128x128xf32>, vector<8x128xf32> -> vector<8x128xf32>
    %cst_13 = arith.constant dense<0.000000e+00> : vector<8x128xf32>
    %27 = tpu.matmul %24, %6, %cst_13 {dimension_numbers = #tpu.dot_dimension_numbers<[1], [0], [0], [1], [0, 0, 1, 1], [], []>} : vector<8x128xf32>, vector<128x128xf32>, vector<8x128xf32> -> vector<8x128xf32>
    %28 = arith.addf %26, %27 : vector<8x128xf32>
    %cst_14 = arith.constant dense<0.000000e+00> : vector<8x128xf32>
    %29 = tpu.matmul %25, %6, %cst_14 {dimension_numbers = #tpu.dot_dimension_numbers<[1], [0], [0], [1], [0, 0, 1, 1], [], []>} : vector<8x128xf32>, vector<128x128xf32>, vector<8x128xf32> -> vector<8x128xf32>
    %30 = arith.addf %28, %29 : vector<8x128xf32>
    %31 = arith.addf %19, %30 : vector<8x128xf32>
    %c0_15 = arith.constant 0 : index
    %c0_16 = arith.constant 0 : index
    %32 = vector.load %arg6[%c0_15, %c0_16] : memref<8x128xf32, #tpu.memory_space<vmem>>, vector<8x128xf32>
    tpu.vector_store %arg6[%c0_15, %c0_16], %31 {strides = array<i32>} : memref<8x128xf32, #tpu.memory_space<vmem>>, vector<8x128xf32>,
    %33 = arith.truncf %7 : vector<16x128xf32> to vector<16x128xbf16>
    %34 = arith.extf %33 : vector<16x128xbf16> to vector<16x128xf32>
    %35 = arith.subf %7, %34 : vector<16x128xf32>
    %36 = arith.truncf %35 : vector<16x128xf32> to vector<16x128xbf16>
    %37 = arith.extf %36 : vector<16x128xbf16> to vector<16x128xf32>
    %38 = arith.subf %35, %37 : vector<16x128xf32>
    %cst_17 = arith.constant dense<0.000000e+00> : vector<8x128xf32>
    %39 = tpu.matmul %5, %34, %cst_17 {dimension_numbers = #tpu.dot_dimension_numbers<[1], [0], [0], [1], [0, 0, 1, 1], [], []>} : vector<8x16xf32>, vector<16x128xf32>, vector<8x128xf32> -> vector<8x128xf32>
    %cst_18 = arith.constant dense<0.000000e+00> : vector<8x128xf32>
    %40 = tpu.matmul %5, %37, %cst_18 {dimension_numbers = #tpu.dot_dimension_numbers<[1], [0], [0], [1], [0, 0, 1, 1], [], []>} : vector<8x16xf32>, vector<16x128xf32>, vector<8x128xf32> -> vector<8x128xf32>
    %41 = arith.addf %39, %40 : vector<8x128xf32>
    %cst_19 = arith.constant dense<0.000000e+00> : vector<8x128xf32>
    %42 = tpu.matmul %5, %38, %cst_19 {dimension_numbers = #tpu.dot_dimension_numbers<[1], [0], [0], [1], [0, 0, 1, 1], [], []>} : vector<8x16xf32>, vector<16x128xf32>, vector<8x128xf32> -> vector<8x128xf32>
    %43 = arith.addf %41, %42 : vector<8x128xf32>
    %c0_20 = arith.constant 0 : index
    %c0_21 = arith.constant 0 : index
    %44 = vector.load %arg7[%c0_20, %c0_21] : memref<8x128xf32, #tpu.memory_space<vmem>>, vector<8x128xf32>
    %45 = arith.truncf %43 : vector<8x128xf32> to vector<8x128xbf16>
    %46 = arith.extf %45 : vector<8x128xbf16> to vector<8x128xf32>
    %47 = arith.subf %43, %46 : vector<8x128xf32>
    %48 = arith.truncf %47 : vector<8x128xf32> to vector<8x128xbf16>
    %49 = arith.extf %48 : vector<8x128xbf16> to vector<8x128xf32>
    %50 = arith.subf %47, %49 : vector<8x128xf32>
    %cst_22 = arith.constant dense<0.000000e+00> : vector<8x128xf32>
    %51 = tpu.matmul %46, %6, %cst_22 {dimension_numbers = #tpu.dot_dimension_numbers<[1], [0], [0], [1], [0, 0, 1, 1], [], []>} : vector<8x128xf32>, vector<128x128xf32>, vector<8x128xf32> -> vector<8x128xf32>
    %cst_23 = arith.constant dense<0.000000e+00> : vector<8x128xf32>
    %52 = tpu.matmul %49, %6, %cst_23 {dimension_numbers = #tpu.dot_dimension_numbers<[1], [0], [0], [1], [0, 0, 1, 1], [], []>} : vector<8x128xf32>, vector<128x128xf32>, vector<8x128xf32> -> vector<8x128xf32>
    %53 = arith.addf %51, %52 : vector<8x128xf32>
    %cst_24 = arith.constant dense<0.000000e+00> : vector<8x128xf32>
    %54 = tpu.matmul %50, %6, %cst_24 {dimension_numbers = #tpu.dot_dimension_numbers<[1], [0], [0], [1], [0, 0, 1, 1], [], []>} : vector<8x128xf32>, vector<128x128xf32>, vector<8x128xf32> -> vector<8x128xf32>
    %55 = arith.addf %53, %54 : vector<8x128xf32>
    %56 = arith.addf %44, %55 : vector<8x128xf32>
    %c0_25 = arith.constant 0 : index
    %c0_26 = arith.constant 0 : index
    %57 = vector.load %arg7[%c0_25, %c0_26] : memref<8x128xf32, #tpu.memory_space<vmem>>, vector<8x128xf32>
    tpu.vector_store %arg7[%c0_25, %c0_26], %56 {strides = array<i32>} : memref<8x128xf32, #tpu.memory_space<vmem>>, vector<8x128xf32>,
    %c3_i32 = arith.constant 3 : i32
    %58 = arith.cmpi eq, %arg1, %c3_i32 : i32
    %59 = arith.extui %58 : i1 to i32
    %c0_i32_27 = arith.constant 0 : i32
    %60 = arith.cmpi ne, %59, %c0_i32_27 : i32
    scf.if %60 {
      %c0_28 = arith.constant 0 : index
      %c0_29 = arith.constant 0 : index
      %61 = vector.load %arg6[%c0_28, %c0_29] : memref<8x128xf32, #tpu.memory_space<vmem>>, vector<8x128xf32>
      %c0_30 = arith.constant 0 : index
      %c0_31 = arith.constant 0 : index
      %62 = vector.load %arg7[%c0_30, %c0_31] : memref<8x128xf32, #tpu.memory_space<vmem>>, vector<8x128xf32>
      %cst_32 = arith.constant 1.562500e-02 : f32
      %63 = vector.broadcast %cst_32 : f32 to vector<8x128xf32>
      %64 = arith.mulf %61, %63 : vector<8x128xf32>
      %cst_33 = arith.constant 6.400000e+01 : f32
      %65 = vector.broadcast %cst_33 : f32 to vector<8x128xf32>
      %66 = arith.mulf %65, %64 : vector<8x128xf32>
      %67 = arith.mulf %66, %64 : vector<8x128xf32>
      %68 = arith.subf %62, %67 : vector<8x128xf32>
      %cst_34 = arith.constant 0.0158730168 : f32
      %69 = vector.broadcast %cst_34 : f32 to vector<8x128xf32>
      %70 = arith.mulf %68, %69 : vector<8x128xf32>
      %cst_35 = arith.constant 1.562500e-02 : f32
      %71 = vector.broadcast %cst_35 : f32 to vector<8x128xf32>
      %72 = arith.mulf %62, %71 : vector<8x128xf32>
      %73 = arith.mulf %64, %64 : vector<8x128xf32>
      %74 = arith.subf %72, %73 : vector<8x128xf32>
      %cst_36 = arith.constant 2.000000e+00 : f32
      %75 = vector.broadcast %cst_36 : f32 to vector<8x128xf32>
      %76 = arith.mulf %75, %64 : vector<8x128xf32>
      %77 = arith.mulf %76, %64 : vector<8x128xf32>
      %cst_37 = arith.constant 9.99999974E-5 : f32
      %78 = vector.broadcast %cst_37 : f32 to vector<8x128xf32>
      %79 = arith.addf %77, %78 : vector<8x128xf32>
      %cst_38 = arith.constant 2.000000e+00 : f32
      %80 = vector.broadcast %cst_38 : f32 to vector<8x128xf32>
      %81 = arith.mulf %80, %74 : vector<8x128xf32>
      %cst_39 = arith.constant 8.99999984E-4 : f32
      %82 = vector.broadcast %cst_39 : f32 to vector<8x128xf32>
      %83 = arith.addf %81, %82 : vector<8x128xf32>
      %84 = arith.mulf %79, %83 : vector<8x128xf32>
      %85 = arith.mulf %64, %64 : vector<8x128xf32>
      %86 = arith.mulf %64, %64 : vector<8x128xf32>
      %87 = arith.addf %85, %86 : vector<8x128xf32>
      %cst_40 = arith.constant 9.99999974E-5 : f32
      %88 = vector.broadcast %cst_40 : f32 to vector<8x128xf32>
      %89 = arith.addf %87, %88 : vector<8x128xf32>
      %90 = arith.mulf %70, %70 : vector<8x128xf32>
      %91 = arith.mulf %70, %70 : vector<8x128xf32>
      %92 = arith.addf %90, %91 : vector<8x128xf32>
      %cst_41 = arith.constant 8.99999984E-4 : f32
      %93 = vector.broadcast %cst_41 : f32 to vector<8x128xf32>
      %94 = arith.addf %92, %93 : vector<8x128xf32>
      %95 = arith.mulf %89, %94 : vector<8x128xf32>
      %96 = arith.divf %84, %95 : vector<8x128xf32>
      %cst_42 = arith.constant 1.000000e+00 : f32
      %97 = vector.broadcast %cst_42 : f32 to vector<8x128xf32>
      %98 = arith.subf %97, %96 : vector<8x128xf32>
      %cst_43 = arith.constant 5.000000e-01 : f32
      %99 = vector.broadcast %cst_43 : f32 to vector<8x128xf32>
      %100 = arith.mulf %98, %99 : vector<8x128xf32>
      %c0_44 = arith.constant 0 : index
      %c0_45 = arith.constant 0 : index
      %c0_46 = arith.constant 0 : index
      %101 = vector.load %arg5[%c0_44, %c0_45, %c0_46] : memref<1x8x128xf32, #tpu.memory_space<vmem>>, vector<1x8x128xf32>
      %102 = vector.shape_cast %101 : vector<1x8x128xf32> to vector<8x128xf32>
      %103 = vector.shape_cast %100 : vector<8x128xf32> to vector<1x8x128xf32>
      tpu.vector_store %arg5[%c0_44, %c0_45, %c0_46], %103 {strides = array<i32>} : memref<1x8x128xf32, #tpu.memory_space<vmem>>, vector<1x8x128xf32>,
    } else {
    }
    return
  }
  func.func @transform_0(%arg0: i32, %arg1: i32) -> (i32, i32, i32, i32) {
    %c0_i32 = arith.constant 0 : i32
    %c0_i32_0 = arith.constant 0 : i32
    %c0_i32_1 = arith.constant 0 : i32
    return %arg0, %arg1, %c0_i32, %c0_i32_0 : i32, i32, i32, i32
  }
  func.func @transform_1(%arg0: i32, %arg1: i32) -> (i32, i32) {
    %c0_i32 = arith.constant 0 : i32
    %c0_i32_0 = arith.constant 0 : i32
    %c0_i32_1 = arith.constant 0 : i32
    return %c0_i32, %c0_i32_0 : i32, i32
  }
  func.func @transform_2(%arg0: i32, %arg1: i32) -> (i32, i32) {
    %c0_i32 = arith.constant 0 : i32
    %c0_i32_0 = arith.constant 0 : i32
    %c0_i32_1 = arith.constant 0 : i32
    return %c0_i32, %c0_i32_0 : i32, i32
  }
  func.func @transform_3(%arg0: i32, %arg1: i32) -> (i32, i32, i32) {
    %c0_i32 = arith.constant 0 : i32
    %c0_i32_0 = arith.constant 0 : i32
    %c0_i32_1 = arith.constant 0 : i32
    return %arg0, %c0_i32, %c0_i32_0 : i32, i32, i32
  }
}

</mosaic_0001>

<llo_original>
// kernel: dssim_loss.1
$region0: #{dssim_loss.1}
  #allocation0 [shape = 'u32[]', space=smem, size = 0x4, offset = 0x4, fixed_abs, tag = 'smem constant byte address 0x4 - core index']
  #allocation1 [shape = 'u32[144,128]{1,0:T(1,128)}', space=vmem, size = 0x12000, scoped, tag = 'internal scratch']
  #allocation2 [shape = 'f32[8,128]{1,0:T(8,128)}', space=vmem, size = 0x1000, scoped, tag = 'scratch operand']
  #allocation3 [shape = 'f32[8,128]{1,0:T(8,128)}', space=vmem, size = 0x1000, scoped, tag = 'scratch operand']
  %s0 = inlined_call_operand.vmem [shape: f32[2,4,16,128], index: 0, kind: input, shape index: {}]
  %s1 = inlined_call_operand.vmem [shape: f32[8,16], index: 1, kind: input, shape index: {}]
  %s2 = inlined_call_operand.vmem [shape: f32[128,128], index: 2, kind: input, shape index: {}]
  %s3 = inlined_call_operand.vmem [shape: f32[2,8,128], index: 3, kind: output, shape index: {}]
  %s4 = sld [smem:[#allocation0]]
  $region53: #{dssim_loss.1} parent=0
    _
  %s6 = ssub.s32 1, %s4
  %s7 = scalar_select 0, %s6, %s4
  loop: start=0, step=1, limit=10
  $region2: #{dssim_loss.1} parent=0 // loop_pre_header
    _
  $region3: #{dssim_loss.1} parent=0 // loop_header
    %s9 = sphi 0, %s13
    %p10 = scmp.ge.s32.totalorder %s9, 10
    %s16 = sphi 0, %s28
    %s17 = sphi 0, %s24
    %s18 = sphi 0, %s16
    %s19 = sphi 0, %s17
    %s20 = sphi 0, %s18
    %s21 = sphi 0, %s19
    %s33 = sphi 0, %s35
    %s36 = sphi 0, %s33
    %s37 = sphi 0, %s36
    %s53 = sphi 0, %s37
    %s57 = sphi 0, %s57
    %s59 = sphi 0, %s57
    %s60 = sphi 0, %s59
    %s74 = sphi 0, %s60
    %s78 = sphi 0, %s78
    %s80 = sphi 0, %s78
    %s81 = sphi 0, %s80
    %s95 = sphi 0, %s81
    %s101 = sphi 0, %s103
    %s104 = sphi 0, %s101
    %s105 = sphi 0, %s104
    %s121 = sphi 0, %s105
  $region4: #{dssim_loss.1} parent=0 // loop_header_branch
    %12 = sbr.rel (%p10) target = $region8
  $region5: #{dssim_loss.1} parent=0 // loop_body
    %s14 = ssub.s32 %s9, 1
    %s15 = ssub.s32 %s9, 2
    %s22 = sadd.s32 1, %s17
    %p23 = scmp.ge.s32.totalorder %s22, 4
    %s24 = scalar_select %p23, 0, %s22
    %s25 = sadd.s32 1, %s16
    %s26 = scalar_select %p23, %s25, %s16
    %p27 = scmp.ge.s32.totalorder %s26, 2
    %s28 = scalar_select %p27, 0, %s26
    %s29 = ssub.s32 %s16, %s28
    %s30 = ssub.s32 %s17, %s24
    %s31 = sor.u32 %s29, %s30
    %p32 = scmp.eq.s32.totalorder %s31, 0
    %s34 = sadd.s32 %s33, 1
    %s35 = scalar_select %p32, %s33, %s34
    %p38 = pneg %p32
    %p39 = scmp.eq.s32.totalorder %s9, 7
    %p40 = por %p38, %p39
    %p41 = scmp.ne.s32.totalorder %s33, %s36
    %p42 = scmp.eq.s32.totalorder %s9, 0
    %p43 = por %p41, %p42
    %p44 = scmp.ne.s32.totalorder %s33, %s36
    %p45 = scmp.eq.s32.totalorder %s14, 7
    %p46 = por %p44, %p45
    %p47 = scmp.ne.s32.totalorder %s36, %s37
    %p48 = scmp.eq.s32.totalorder %s14, 0
    %p49 = por %p47, %p48
    %p50 = scmp.ne.s32.totalorder %s36, %s37
    %p51 = scmp.eq.s32.totalorder %s15, 7
    %p52 = por %p50, %p51
    %p54 = scmp.ne.s32.totalorder %s37, %s53
    %p55 = scmp.eq.s32.totalorder %s15, 0
    %p56 = por %p54, %p55
    %s58 = sadd.s32 %s57, 1
    %p61 = scmp.eq.s32.totalorder %s9, 7
    %p62 = scmp.ne.s32.totalorder %s57, %s59
    %p63 = scmp.eq.s32.totalorder %s9, 0
    %p64 = por %p62, %p63
    %p65 = scmp.ne.s32.totalorder %s57, %s59
    %p66 = scmp.eq.s32.totalorder %s14, 7
    %p67 = por %p65, %p66
    %p68 = scmp.ne.s32.totalorder %s59, %s60
    %p69 = scmp.eq.s32.totalorder %s14, 0
    %p70 = por %p68, %p69
    %p71 = scmp.ne.s32.totalorder %s59, %s60
    %p72 = scmp.eq.s32.totalorder %s15, 7
    %p73 = por %p71, %p72
    %p75 = scmp.ne.s32.totalorder %s60, %s74
    %p76 = scmp.eq.s32.totalorder %s15, 0
    %p77 = por %p75, %p76
    %s79 = sadd.s32 %s78, 1
    %p82 = scmp.eq.s32.totalorder %s9, 7
    %p83 = scmp.ne.s32.totalorder %s78, %s80
    %p84 = scmp.eq.s32.totalorder %s9, 0
    %p85 = por %p83, %p84
    %p86 = scmp.ne.s32.totalorder %s78, %s80
    %p87 = scmp.eq.s32.totalorder %s14, 7
    %p88 = por %p86, %p87
    %p89 = scmp.ne.s32.totalorder %s80, %s81
    %p90 = scmp.eq.s32.totalorder %s14, 0
    %p91 = por %p89, %p90
    %p92 = scmp.ne.s32.totalorder %s80, %s81
    %p93 = scmp.eq.s32.totalorder %s15, 7
    %p94 = por %p92, %p93
    %p96 = scmp.ne.s32.totalorder %s81, %s95
    %p97 = scmp.eq.s32.totalorder %s15, 0
    %p98 = por %p96, %p97
    %s99 = ssub.s32 %s16, %s28
    %p100 = scmp.eq.s32.totalorder %s99, 0
    %s102 = sadd.s32 %s101, 1
    %s103 = scalar_select %p100, %s101, %s102
    %p106 = pneg %p100
    %p107 = scmp.eq.s32.totalorder %s9, 7
    %p108 = por %p106, %p107
    %p109 = scmp.ne.s32.totalorder %s101, %s104
    %p110 = scmp.eq.s32.totalorder %s9, 0
    %p111 = por %p109, %p110
    %p112 = scmp.ne.s32.totalorder %s101, %s104
    %p113 = scmp.eq.s32.totalorder %s14, 7
    %p114 = por %p112, %p113
    %p115 = scmp.ne.s32.totalorder %s104, %s105
    %p116 = scmp.eq.s32.totalorder %s14, 0
    %p117 = por %p115, %p116
    %p118 = scmp.ne.s32.totalorder %s104, %s105
    %p119 = scmp.eq.s32.totalorder %s15, 7
    %p120 = por %p118, %p119
    %p122 = scmp.ne.s32.totalorder %s105, %s121
    %p123 = scmp.eq.s32.totalorder %s15, 0
    %p124 = por %p122, %p123
    %p125 = scmp.le.s32.totalorder 1, %s9
    %p126 = scmp.lt.s32.totalorder %s9, 9
    %p127 = pnand %p125, %p126
    %p128 = pneg %p127
    // Predicated region
    $region9: #{dssim_loss.1} parent=5 // pred_check
      _
    $region10: #{dssim_loss.1} parent=5 // pred_check_branch
      %130 = sbr.rel (%p127) target = $region12
    $region11: #{dssim_loss.1} parent=5 // pred_region
      %s131 = ssub.s32 %s9, 1
      // Predicated region
      $region13: #{dssim_loss.1} parent=11 // pred_check
        %p132 = pneg %p70
      $region14: #{dssim_loss.1} parent=11 // pred_check_branch
        %134 = sbr.rel (%p132) target = $region16
      $region15: #{dssim_loss.1} parent=11 // pred_region
        _
      $region16: #{dssim_loss.1} parent=11 // pred_fallthru
        _
      // Predicated region
      $region17: #{dssim_loss.1} parent=11 // pred_check
        %p135 = pneg %p91
      $region18: #{dssim_loss.1} parent=11 // pred_check_branch
        %137 = sbr.rel (%p135) target = $region20
      $region19: #{dssim_loss.1} parent=11 // pred_region
        _
      $region20: #{dssim_loss.1} parent=11 // pred_fallthru
        _
    $region12: #{dssim_loss.1} parent=5 // pred_fallthru
      _
    %p138 = scmp.lt.s32.totalorder %s9, 8
    // Predicated region
    $region21: #{dssim_loss.1} parent=5 // pred_check
      %p139 = pneg %p138
    $region22: #{dssim_loss.1} parent=5 // pred_check_branch
      %141 = sbr.rel (%p139) target = $region24
    $region23: #{dssim_loss.1} parent=5 // pred_region
      // Predicated region
      $region25: #{dssim_loss.1} parent=23 // pred_check
        %p142 = pneg %p43
      $region26: #{dssim_loss.1} parent=23 // pred_check_branch
        %144 = sbr.rel (%p142) target = $region28
      $region27: #{dssim_loss.1} parent=23 // pred_region
        %p145 = scmp.lt.s32.totalorder %s16, 1
        %s146 = scalar_select %p145, %s16, 1
        %p147 = scmp.lt.s32.totalorder %s17, 3
        %s148 = scalar_select %p147, %s17, 3
        %s149 = smul.addr %s148, 2
        %s150 = smul.addr %s146, 8
        %s151 = sadd.s32 %s149, %s150
        %s152 = smul.addr %s151, 8
        %s153 = scalar_lea.vmem %s0, %s152
      $region28: #{dssim_loss.1} parent=23 // pred_fallthru
        _
    $region24: #{dssim_loss.1} parent=5 // pred_fallthru
      _
    %p154 = scmp.le.s32.totalorder 1, %s9
    %p155 = scmp.lt.s32.totalorder %s9, 9
    %p156 = pnand %p154, %p155
    %p157 = pneg %p156
    // Predicated region
    $region29: #{dssim_loss.1} parent=5 // pred_check
      _
    $region30: #{dssim_loss.1} parent=5 // pred_check_branch
      %159 = sbr.rel (%p156) target = $region32
    $region31: #{dssim_loss.1} parent=5 // pred_region
      %s160 = ssub.s32 %s9, 1
      %p161 = scmp.lt.s32.totalorder %s18, 1
      %s162 = scalar_select %p161, %s18, 1
      %p163 = scmp.lt.s32.totalorder %s19, 3
      %s164 = scalar_select %p163, %s19, 3
      %s165 = smul.addr %s164, 2
      %s166 = smul.addr %s162, 8
      %s167 = sadd.s32 %s165, %s166
      %s168 = smul.addr %s167, 8
      %s169 = scalar_lea.vmem %s0, %s168
      %p170 = pneg %p49
      %p171 = pneg %p46
      %p172 = pneg %p70
      %p173 = pneg %p67
      %p174 = pneg %p91
      %p175 = pneg %p88
      %p176 = pneg %p117
      %p177 = pneg %p114
      %p178 = scmp.lt.s32.totalorder %s18, 1
      %s179 = scalar_select %p178, %s18, 1
      %s180 = smul.addr %s179, 8
      %s181 = scalar_lea.vmem %s3, %s180
      %p182 = scmp.lt.s32.totalorder %s18, 1
      %s183 = scalar_select %p182, %s18, 1
      %p184 = scmp.lt.s32.totalorder %s19, 3
      %s185 = scalar_select %p184, %s19, 3
      %s186 = smul.addr %s185, 2
      %s187 = smul.addr %s183, 8
      %s188 = sadd.s32 %s186, %s187
      %s189 = smul.addr %s188, 8
      %s190 = scalar_lea.vmem %s0, %s189
      %p191 = scmp.lt.s32.totalorder %s18, 1
      %s192 = scalar_select %p191, %s18, 1
      %s193 = smul.addr %s192, 8
      %s194 = scalar_lea.vmem %s3, %s193
      %p195 = scmp.eq.s32.totalorder %s19, 0
      // Predicated region
      $region33: #{dssim_loss.1} parent=31 // pred_check
        %p196 = pneg %p195
      $region34: #{dssim_loss.1} parent=31 // pred_check_branch
        %198 = sbr.rel (%p196) target = $region36
      $region35: #{dssim_loss.1} parent=31 // pred_region
        %199 = vst [vmem:[#allocation2] sm:$0xff] 0.0
        %200 = vst [vmem:[#allocation3] sm:$0xff] 0.0
      $region36: #{dssim_loss.1} parent=31 // pred_fallthru
        _
      %v201 = vld [vmem:[%s190] sm:$0xff]
      %v202 = vld [vmem:[%s190 + $0x8] sm:$0xff]
      %v203 = vld [vmem:[%s1] sm:$0xff]
      %v204 = vld [vmem:[%s2] sm:$0xff]
      %v205 = vld [vmem:[%s2 + $0x8] sm:$0xff]
      %v206 = vld [vmem:[%s2 + $0x10] sm:$0xff]
      %v207 = vld [vmem:[%s2 + $0x18] sm:$0xff]
      %v208 = vld [vmem:[%s2 + $0x20] sm:$0xff]
      %v209 = vld [vmem:[%s2 + $0x28] sm:$0xff]
      %v210 = vld [vmem:[%s2 + $0x30] sm:$0xff]
      %v211 = vld [vmem:[%s2 + $0x38] sm:$0xff]
      %v212 = vld [vmem:[%s2 + $0x40] sm:$0xff]
      %v213 = vld [vmem:[%s2 + $0x48] sm:$0xff]
      %v214 = vld [vmem:[%s2 + $0x50] sm:$0xff]
      %v215 = vld [vmem:[%s2 + $0x58] sm:$0xff]
      %v216 = vld [vmem:[%s2 + $0x60] sm:$0xff]
      %v217 = vld [vmem:[%s2 + $0x68] sm:$0xff]
      %v218 = vld [vmem:[%s2 + $0x70] sm:$0xff]
      %v219 = vld [vmem:[%s2 + $0x78] sm:$0xff]
      %v220 = vmul.f32 %v201, %v201
      %v221 = vmul.f32 %v202, %v202
      %v222 = vpack.c.bf16 %v202, %v201
      %v223 = vunpack.c.l.bf16 %v222
      %v224 = vunpack.c.h.bf16 %v222
      %v225 = vsub.f32 %v201, %v223
      %v226 = vsub.f32 %v202, %v224
      %v227 = vpack.c.bf16 %v226, %v225
      %v228 = vunpack.c.l.bf16 %v227
      %v229 = vunpack.c.h.bf16 %v227
      %v230 = vsub.f32 %v225, %v228
      %v231 = vsub.f32 %v226, %v229
      %vm232 = vcmask 130048
      %v234 = vsel %vm232, %v203, 0
      %236 = vmatprep.subr.mxu0 0.0
      %237 = vmatpush1.msra.mxu0 0.0
      %238 = vmatprep.subr.mxu0 0.0
      %239 = vmatpush1.msra.mxu0 0.0
      %240 = vmatprep.subr.mxu0 0.0
      %241 = vmatpush1.msra.mxu0 0.0
      %242 = vmatprep.subr.mxu0 0.0
      %243 = vmatpush1.msra.mxu0 0.0
      %244 = vmatprep.subr.mxu0 0.0
      %245 = vmatpush1.msra.mxu0 0.0
      %246 = vmatprep.subr.mxu0 0.0
      %247 = vmatpush1.msra.mxu0 0.0
      %248 = vmatprep.subr.mxu0 0.0
      %249 = vmatpush1.msra.mxu0 0.0
      %250 = vmatprep.subr.mxu0 0.0
      %251 = vmatpush1.msra.mxu0 0.0
      %252 = vmatprep.subr.mxu0 0.0
      %253 = vmatpush1.msra.mxu0 0.0
      %254 = vmatprep.subr.mxu0 0.0
      %255 = vmatpush1.msra.mxu0 0.0
      %256 = vmatprep.subr.mxu0 0.0
      %257 = vmatpush1.msra.mxu0 0.0
      %258 = vmatprep.subr.mxu0 0.0
      %259 = vmatpush1.msra.mxu0 0.0
      %260 = vmatprep.subr.mxu0 0.0
      %261 = vmatpush1.msra.mxu0 0.0
      %262 = vmatprep.subr.mxu0 0.0
      %263 = vmatpush1.msra.mxu0 0.0
      %264 = vmatprep.subr.mxu0 0.0
      %265 = vmatpush1.msra.mxu0 %v229
      %266 = vmatprep.subr.mxu0 0.0
      %267 = vmatpush1.msra.mxu0 %v228
      %268 = vmatprep.subr.mxu0 0.0
      %269 = vmatpush2.msra.mxu0 0.0
      %270 = vmatprep.subr.mxu0 0.0
      %271 = vmatpush2.msra.mxu0 0.0
      %272 = vmatprep.subr.mxu0 0.0
      %273 = vmatpush2.msra.mxu0 0.0
      %274 = vmatprep.subr.mxu0 0.0
      %275 = vmatpush2.msra.mxu0 0.0
      %276 = vmatprep.subr.mxu0 0.0
      %277 = vmatpush2.msra.mxu0 0.0
      %278 = vmatprep.subr.mxu0 0.0
      %279 = vmatpush2.msra.mxu0 0.0
      %280 = vmatprep.subr.mxu0 0.0
      %281 = vmatpush2.msra.mxu0 0.0
      %282 = vmatprep.subr.mxu0 0.0
      %283 = vmatpush2.msra.mxu0 0.0
      %284 = vmatprep.subr.mxu0 0.0
      %285 = vmatpush2.msra.mxu0 0.0
      %286 = vmatprep.subr.mxu0 0.0
      %287 = vmatpush2.msra.mxu0 0.0
      %288 = vmatprep.subr.mxu0 0.0
      %289 = vmatpush2.msra.mxu0 0.0
      %290 = vmatprep.subr.mxu0 0.0
      %291 = vmatpush2.msra.mxu0 0.0
      %292 = vmatprep.subr.mxu0 0.0
      %293 = vmatpush2.msra.mxu0 0.0
      %294 = vmatprep.subr.mxu0 0.0
      %295 = vmatpush2.msra.mxu0 0.0
      %296 = vmatprep.subr.mxu0 0.0
      %297 = vmatpush2.msra.mxu0 0.0
      %298 = vmatprep.subr.mxu0 0.0
      %299 = vmatpush2.msra.mxu0 0.0
      %300 = vmatprep.mubr.f32.mxu0 0.0
      %301 = vmatmul.mubr.f32.gmra.mxu0 %v234
      %v302 = vpop.f32.mrf.mxu0
      %v303 = vadd.f32 0.0, %v302
      %v304 = vpop.f32.mrf.mxu0
      %305 = vdwg.mxu0
      %306 = vmatprep.subr.mxu0 0.0
      %307 = vmatpush1.msra.mxu0 0.0
      %308 = vmatprep.subr.mxu0 0.0
      %309 = vmatpush1.msra.mxu0 0.0
      %310 = vmatprep.subr.mxu0 0.0
      %311 = vmatpush1.msra.mxu0 0.0
      %312 = vmatprep.subr.mxu0 0.0
      %313 = vmatpush1.msra.mxu0 0.0
      %314 = vmatprep.subr.mxu0 0.0
      %315 = vmatpush1.msra.mxu0 0.0
      %316 = vmatprep.subr.mxu0 0.0
      %317 = vmatpush1.msra.mxu0 0.0
      %318 = vmatprep.subr.mxu0 0.0
      %319 = vmatpush1.msra.mxu0 0.0
      %320 = vmatprep.subr.mxu0 0.0
      %321 = vmatpush1.msra.mxu0 0.0
      %322 = vmatprep.subr.mxu0 0.0
      %323 = vmatpush1.msra.mxu0 0.0
      %324 = vmatprep.subr.mxu0 0.0
      %325 = vmatpush1.msra.mxu0 0.0
      %326 = vmatprep.subr.mxu0 0.0
      %327 = vmatpush1.msra.mxu0 0.0
      %328 = vmatprep.subr.mxu0 0.0
      %329 = vmatpush1.msra.mxu0 0.0
      %330 = vmatprep.subr.mxu0 0.0
      %331 = vmatpush1.msra.mxu0 0.0
      %332 = vmatprep.subr.mxu0 0.0
      %333 = vmatpush1.msra.mxu0 0.0
      %334 = vmatprep.subr.mxu0 0.0
      %335 = vmatpush1.msra.mxu0 %v224
      %336 = vmatprep.subr.mxu0 0.0
      %337 = vmatpush1.msra.mxu0 %v223
      %338 = vmatprep.subr.mxu0 0.0
      %339 = vmatpush2.msra.mxu0 0.0
      %340 = vmatprep.subr.mxu0 0.0
      %341 = vmatpush2.msra.mxu0 0.0
      %342 = vmatprep.subr.mxu0 0.0
      %343 = vmatpush2.msra.mxu0 0.0
      %344 = vmatprep.subr.mxu0 0.0
      %345 = vmatpush2.msra.mxu0 0.0
      %346 = vmatprep.subr.mxu0 0.0
      %347 = vmatpush2.msra.mxu0 0.0
      %348 = vmatprep.subr.mxu0 0.0
      %349 = vmatpush2.msra.mxu0 0.0
      %350 = vmatprep.subr.mxu0 0.0
      %351 = vmatpush2.msra.mxu0 0.0
      %352 = vmatprep.subr.mxu0 0.0
      %353 = vmatpush2.msra.mxu0 0.0
      %354 = vmatprep.subr.mxu0 0.0
      %355 = vmatpush2.msra.mxu0 0.0
      %356 = vmatprep.subr.mxu0 0.0
      %357 = vmatpush2.msra.mxu0 0.0
      %358 = vmatprep.subr.mxu0 0.0
      %359 = vmatpush2.msra.mxu0 0.0
      %360 = vmatprep.subr.mxu0 0.0
      %361 = vmatpush2.msra.mxu0 0.0
      %362 = vmatprep.subr.mxu0 0.0
      %363 = vmatpush2.msra.mxu0 0.0
      %364 = vmatprep.subr.mxu0 0.0
      %365 = vmatpush2.msra.mxu0 0.0
      %366 = vmatprep.subr.mxu0 0.0
      %367 = vmatpush2.msra.mxu0 0.0
      %368 = vmatprep.subr.mxu0 0.0
      %369 = vmatpush2.msra.mxu0 0.0
      %370 = vmatprep.mubr.f32.mxu0 0.0
      %371 = vmatmul.mubr.f32.gmra.mxu0 %v234
      %v372 = vpop.f32.mrf.mxu0
      %v373 = vadd.f32 %v303, %v372
      %v374 = vpop.f32.mrf.mxu0
      %375 = vdwg.mxu0
      %376 = vmatprep.subr.mxu0 0.0
      %377 = vmatpush1.msra.mxu0 0.0
      %378 = vmatprep.subr.mxu0 0.0
      %379 = vmatpush1.msra.mxu0 0.0
      %380 = vmatprep.subr.mxu0 0.0
      %381 = vmatpush1.msra.mxu0 0.0
      %382 = vmatprep.subr.mxu0 0.0
      %383 = vmatpush1.msra.mxu0 0.0
      %384 = vmatprep.subr.mxu0 0.0
      %385 = vmatpush1.msra.mxu0 0.0
      %386 = vmatprep.subr.mxu0 0.0
      %387 = vmatpush1.msra.mxu0 0.0
      %388 = vmatprep.subr.mxu0 0.0
      %389 = vmatpush1.msra.mxu0 0.0
      %390 = vmatprep.subr.mxu0 0.0
      %391 = vmatpush1.msra.mxu0 0.0
      %392 = vmatprep.subr.mxu0 0.0
      %393 = vmatpush1.msra.mxu0 0.0
      %394 = vmatprep.subr.mxu0 0.0
      %395 = vmatpush1.msra.mxu0 0.0
      %396 = vmatprep.subr.mxu0 0.0
      %397 = vmatpush1.msra.mxu0 0.0
      %398 = vmatprep.subr.mxu0 0.0
      %399 = vmatpush1.msra.mxu0 0.0
      %400 = vmatprep.subr.mxu0 0.0
      %401 = vmatpush1.msra.mxu0 0.0
      %402 = vmatprep.subr.mxu0 0.0
      %403 = vmatpush1.msra.mxu0 0.0
      %404 = vmatprep.subr.mxu0 0.0
      %405 = vmatpush1.msra.mxu0 %v231
      %406 = vmatprep.subr.mxu0 0.0
      %407 = vmatpush1.msra.mxu0 %v230
      %408 = vmatprep.subr.mxu0 0.0
      %409 = vmatpush2.msra.mxu0 0.0
      %410 = vmatprep.subr.mxu0 0.0
      %411 = vmatpush2.msra.mxu0 0.0
      %412 = vmatprep.subr.mxu0 0.0
      %413 = vmatpush2.msra.mxu0 0.0
      %414 = vmatprep.subr.mxu0 0.0
      %415 = vmatpush2.msra.mxu0 0.0
      %416 = vmatprep.subr.mxu0 0.0
      %417 = vmatpush2.msra.mxu0 0.0
      %418 = vmatprep.subr.mxu0 0.0
      %419 = vmatpush2.msra.mxu0 0.0
      %420 = vmatprep.subr.mxu0 0.0
      %421 = vmatpush2.msra.mxu0 0.0
      %422 = vmatprep.subr.mxu0 0.0
      %423 = vmatpush2.msra.mxu0 0.0
      %424 = vmatprep.subr.mxu0 0.0
      %425 = vmatpush2.msra.mxu0 0.0
      %426 = vmatprep.subr.mxu0 0.0
      %427 = vmatpush2.msra.mxu0 0.0
      %428 = vmatprep.subr.mxu0 0.0
      %429 = vmatpush2.msra.mxu0 0.0
      %430 = vmatprep.subr.mxu0 0.0
      %431 = vmatpush2.msra.mxu0 0.0
      %432 = vmatprep.subr.mxu0 0.0
      %433 = vmatpush2.msra.mxu0 0.0
      %434 = vmatprep.subr.mxu0 0.0
      %435 = vmatpush2.msra.mxu0 0.0
      %436 = vmatprep.subr.mxu0 0.0
      %437 = vmatpush2.msra.mxu0 0.0
      %438 = vmatprep.subr.mxu0 0.0
      %439 = vmatpush2.msra.mxu0 0.0
      %440 = vmatprep.mubr.f32.mxu0 0.0
      %441 = vmatmul.mubr.f32.gmra.mxu0 %v234
      %v442 = vpop.f32.mrf.mxu0
      %v443 = vadd.f32 0.0, %v442
      %v444 = vpop.f32.mrf.mxu0
      %445 = vdwg.mxu0
      %v446 = vadd.f32 %v373, %v443
      %v447 = vld [vmem:[#allocation2] sm:$0xff]
      %v448 = vpack.c.bf16 %v446, %v446
      %v449 = vunpack.c.l.bf16 %v448
      %v450 = vsub.f32 %v446, %v449
      %v451 = vpack.c.bf16 %v450, %v450
      %v452 = vunpack.c.l.bf16 %v451
      %v453 = vsub.f32 %v450, %v452
      %454 = vmatprep.subr.mxu0 0.0
      %455 = vmatpush1.msra.mxu0 %v219
      %456 = vmatprep.subr.mxu0 0.0
      %457 = vmatpush1.msra.mxu0 %v218
      %458 = vmatprep.subr.mxu0 0.0
      %459 = vmatpush1.msra.mxu0 %v217
      %460 = vmatprep.subr.mxu0 0.0
      %461 = vmatpush1.msra.mxu0 %v216
      %462 = vmatprep.subr.mxu0 0.0
      %463 = vmatpush1.msra.mxu0 %v215
      %464 = vmatprep.subr.mxu0 0.0
      %465 = vmatpush1.msra.mxu0 %v214
      %466 = vmatprep.subr.mxu0 0.0
      %467 = vmatpush1.msra.mxu0 %v213
      %468 = vmatprep.subr.mxu0 0.0
      %469 = vmatpush1.msra.mxu0 %v212
      %470 = vmatprep.subr.mxu0 0.0
      %471 = vmatpush1.msra.mxu0 %v211
      %472 = vmatprep.subr.mxu0 0.0
      %473 = vmatpush1.msra.mxu0 %v210
      %474 = vmatprep.subr.mxu0 0.0
      %475 = vmatpush1.msra.mxu0 %v209
      %476 = vmatprep.subr.mxu0 0.0
      %477 = vmatpush1.msra.mxu0 %v208
      %478 = vmatprep.subr.mxu0 0.0
      %479 = vmatpush1.msra.mxu0 %v207
      %480 = vmatprep.subr.mxu0 0.0
      %481 = vmatpush1.msra.mxu0 %v206
      %482 = vmatprep.subr.mxu0 0.0
      %483 = vmatpush1.msra.mxu0 %v205
      %484 = vmatprep.subr.mxu0 0.0
      %485 = vmatpush1.msra.mxu0 %v204
      %486 = vmatprep.subr.mxu0 0.0
      %487 = vmatpush2.msra.mxu0 0.0
      %488 = vmatprep.subr.mxu0 0.0
      %489 = vmatpush2.msra.mxu0 0.0
      %490 = vmatprep.subr.mxu0 0.0
      %491 = vmatpush2.msra.mxu0 0.0
      %492 = vmatprep.subr.mxu0 0.0
      %493 = vmatpush2.msra.mxu0 0.0
      %494 = vmatprep.subr.mxu0 0.0
      %495 = vmatpush2.msra.mxu0 0.0
      %496 = vmatprep.subr.mxu0 0.0
      %497 = vmatpush2.msra.mxu0 0.0
      %498 = vmatprep.subr.mxu0 0.0
      %499 = vmatpush2.msra.mxu0 0.0
      %500 = vmatprep.subr.mxu0 0.0
      %501 = vmatpush2.msra.mxu0 0.0
      %502 = vmatprep.subr.mxu0 0.0
      %503 = vmatpush2.msra.mxu0 0.0
      %504 = vmatprep.subr.mxu0 0.0
      %505 = vmatpush2.msra.mxu0 0.0
      %506 = vmatprep.subr.mxu0 0.0
      %507 = vmatpush2.msra.mxu0 0.0
      %508 = vmatprep.subr.mxu0 0.0
      %509 = vmatpush2.msra.mxu0 0.0
      %510 = vmatprep.subr.mxu0 0.0
      %511 = vmatpush2.msra.mxu0 0.0
      %512 = vmatprep.subr.mxu0 0.0
      %513 = vmatpush2.msra.mxu0 0.0
      %514 = vmatprep.subr.mxu0 0.0
      %515 = vmatpush2.msra.mxu0 0.0
      %516 = vmatprep.subr.mxu0 0.0
      %517 = vmatpush2.msra.mxu0 0.0
      %518 = vmatprep.mubr.f32.mxu0 0.0
      %519 = vmatmul.mubr.f32.gmra.mxu0 %v452
      %v520 = vpop.f32.mrf.mxu0
      %v521 = vadd.f32 0.0, %v520
      %v522 = vpop.f32.mrf.mxu0
      %523 = vdwg.mxu0
      %524 = vmatprep.subr.mxu0 0.0
      %525 = vmatpush1.msra.mxu0 %v219
      %526 = vmatprep.subr.mxu0 0.0
      %527 = vmatpush1.msra.mxu0 %v218
      %528 = vmatprep.subr.mxu0 0.0
      %529 = vmatpush1.msra.mxu0 %v217
      %530 = vmatprep.subr.mxu0 0.0
      %531 = vmatpush1.msra.mxu0 %v216
      %532 = vmatprep.subr.mxu0 0.0
      %533 = vmatpush1.msra.mxu0 %v215
      %534 = vmatprep.subr.mxu0 0.0
      %535 = vmatpush1.msra.mxu0 %v214
      %536 = vmatprep.subr.mxu0 0.0
      %537 = vmatpush1.msra.mxu0 %v213
      %538 = vmatprep.subr.mxu0 0.0
      %539 = vmatpush1.msra.mxu0 %v212
      %540 = vmatprep.subr.mxu0 0.0
      %541 = vmatpush1.msra.mxu0 %v211
      %542 = vmatprep.subr.mxu0 0.0
      %543 = vmatpush1.msra.mxu0 %v210
      %544 = vmatprep.subr.mxu0 0.0
      %545 = vmatpush1.msra.mxu0 %v209
      %546 = vmatprep.subr.mxu0 0.0
      %547 = vmatpush1.msra.mxu0 %v208
      %548 = vmatprep.subr.mxu0 0.0
      %549 = vmatpush1.msra.mxu0 %v207
      %550 = vmatprep.subr.mxu0 0.0
      %551 = vmatpush1.msra.mxu0 %v206
      %552 = vmatprep.subr.mxu0 0.0
      %553 = vmatpush1.msra.mxu0 %v205
      %554 = vmatprep.subr.mxu0 0.0
      %555 = vmatpush1.msra.mxu0 %v204
      %556 = vmatprep.subr.mxu0 0.0
      %557 = vmatpush2.msra.mxu0 0.0
      %558 = vmatprep.subr.mxu0 0.0
      %559 = vmatpush2.msra.mxu0 0.0
      %560 = vmatprep.subr.mxu0 0.0
      %561 = vmatpush2.msra.mxu0 0.0
      %562 = vmatprep.subr.mxu0 0.0
      %563 = vmatpush2.msra.mxu0 0.0
      %564 = vmatprep.subr.mxu0 0.0
      %565 = vmatpush2.msra.mxu0 0.0
      %566 = vmatprep.subr.mxu0 0.0
      %567 = vmatpush2.msra.mxu0 0.0
      %568 = vmatprep.subr.mxu0 0.0
      %569 = vmatpush2.msra.mxu0 0.0
      %570 = vmatprep.subr.mxu0 0.0
      %571 = vmatpush2.msra.mxu0 0.0
      %572 = vmatprep.subr.mxu0 0.0
      %573 = vmatpush2.msra.mxu0 0.0
      %574 = vmatprep.subr.mxu0 0.0
      %575 = vmatpush2.msra.mxu0 0.0
      %576 = vmatprep.subr.mxu0 0.0
      %577 = vmatpush2.msra.mxu0 0.0
      %578 = vmatprep.subr.mxu0 0.0
      %579 = vmatpush2.msra.mxu0 0.0
      %580 = vmatprep.subr.mxu0 0.0
      %581 = vmatpush2.msra.mxu0 0.0
      %582 = vmatprep.subr.mxu0 0.0
      %583 = vmatpush2.msra.mxu0 0.0
      %584 = vmatprep.subr.mxu0 0.0
      %585 = vmatpush2.msra.mxu0 0.0
      %586 = vmatprep.subr.mxu0 0.0
      %587 = vmatpush2.msra.mxu0 0.0
      %588 = vmatprep.mubr.f32.mxu0 0.0
      %589 = vmatmul.mubr.f32.gmra.mxu0 %v449
      %v590 = vpop.f32.mrf.mxu0
      %v591 = vadd.f32 %v521, %v590
      %v592 = vpop.f32.mrf.mxu0
      %593 = vdwg.mxu0
      %594 = vmatprep.subr.mxu0 0.0
      %595 = vmatpush1.msra.mxu0 %v219
      %596 = vmatprep.subr.mxu0 0.0
      %597 = vmatpush1.msra.mxu0 %v218
      %598 = vmatprep.subr.mxu0 0.0
      %599 = vmatpush1.msra.mxu0 %v217
      %600 = vmatprep.subr.mxu0 0.0
      %601 = vmatpush1.msra.mxu0 %v216
      %602 = vmatprep.subr.mxu0 0.0
      %603 = vmatpush1.msra.mxu0 %v215
      %604 = vmatprep.subr.mxu0 0.0
      %605 = vmatpush1.msra.mxu0 %v214
      %606 = vmatprep.subr.mxu0 0.0
      %607 = vmatpush1.msra.mxu0 %v213
      %608 = vmatprep.subr.mxu0 0.0
      %609 = vmatpush1.msra.mxu0 %v212
      %610 = vmatprep.subr.mxu0 0.0
      %611 = vmatpush1.msra.mxu0 %v211
      %612 = vmatprep.subr.mxu0 0.0
      %613 = vmatpush1.msra.mxu0 %v210
      %614 = vmatprep.subr.mxu0 0.0
      %615 = vmatpush1.msra.mxu0 %v209
      %616 = vmatprep.subr.mxu0 0.0
      %617 = vmatpush1.msra.mxu0 %v208
      %618 = vmatprep.subr.mxu0 0.0
      %619 = vmatpush1.msra.mxu0 %v207
      %620 = vmatprep.subr.mxu0 0.0
      %621 = vmatpush1.msra.mxu0 %v206
      %622 = vmatprep.subr.mxu0 0.0
      %623 = vmatpush1.msra.mxu0 %v205
      %624 = vmatprep.subr.mxu0 0.0
      %625 = vmatpush1.msra.mxu0 %v204
      %626 = vmatprep.subr.mxu0 0.0
      %627 = vmatpush2.msra.mxu0 0.0
      %628 = vmatprep.subr.mxu0 0.0
      %629 = vmatpush2.msra.mxu0 0.0
      %630 = vmatprep.subr.mxu0 0.0
      %631 = vmatpush2.msra.mxu0 0.0
      %632 = vmatprep.subr.mxu0 0.0
      %633 = vmatpush2.msra.mxu0 0.0
      %634 = vmatprep.subr.mxu0 0.0
      %635 = vmatpush2.msra.mxu0 0.0
      %636 = vmatprep.subr.mxu0 0.0
      %637 = vmatpush2.msra.mxu0 0.0
      %638 = vmatprep.subr.mxu0 0.0
      %639 = vmatpush2.msra.mxu0 0.0
      %640 = vmatprep.subr.mxu0 0.0
      %641 = vmatpush2.msra.mxu0 0.0
      %642 = vmatprep.subr.mxu0 0.0
      %643 = vmatpush2.msra.mxu0 0.0
      %644 = vmatprep.subr.mxu0 0.0
      %645 = vmatpush2.msra.mxu0 0.0
      %646 = vmatprep.subr.mxu0 0.0
      %647 = vmatpush2.msra.mxu0 0.0
      %648 = vmatprep.subr.mxu0 0.0
      %649 = vmatpush2.msra.mxu0 0.0
      %650 = vmatprep.subr.mxu0 0.0
      %651 = vmatpush2.msra.mxu0 0.0
      %652 = vmatprep.subr.mxu0 0.0
      %653 = vmatpush2.msra.mxu0 0.0
      %654 = vmatprep.subr.mxu0 0.0
      %655 = vmatpush2.msra.mxu0 0.0
      %656 = vmatprep.subr.mxu0 0.0
      %657 = vmatpush2.msra.mxu0 0.0
      %658 = vmatprep.mubr.f32.mxu0 0.0
      %659 = vmatmul.mubr.f32.gmra.mxu0 %v453
      %v660 = vpop.f32.mrf.mxu0
      %v661 = vadd.f32 0.0, %v660
      %v662 = vpop.f32.mrf.mxu0
      %663 = vdwg.mxu0
      %v664 = vadd.f32 %v591, %v661
      %v665 = vadd.f32 %v447, %v664
      %666 = vst [vmem:[#allocation2] sm:$0xff] %v665
      %v667 = vpack.c.bf16 %v221, %v220
      %v668 = vunpack.c.l.bf16 %v667
      %v669 = vunpack.c.h.bf16 %v667
      %v670 = vsub.f32 %v220, %v668
      %v671 = vsub.f32 %v221, %v669
      %v672 = vpack.c.bf16 %v671, %v670
      %v673 = vunpack.c.l.bf16 %v672
      %v674 = vunpack.c.h.bf16 %v672
      %v675 = vsub.f32 %v670, %v673
      %v676 = vsub.f32 %v671, %v674
      %677 = vmatprep.subr.mxu0 0.0
      %678 = vmatpush1.msra.mxu0 0.0
      %679 = vmatprep.subr.mxu0 0.0
      %680 = vmatpush1.msra.mxu0 0.0
      %681 = vmatprep.subr.mxu0 0.0
      %682 = vmatpush1.msra.mxu0 0.0
      %683 = vmatprep.subr.mxu0 0.0
      %684 = vmatpush1.msra.mxu0 0.0
      %685 = vmatprep.subr.mxu0 0.0
      %686 = vmatpush1.msra.mxu0 0.0
      %687 = vmatprep.subr.mxu0 0.0
      %688 = vmatpush1.msra.mxu0 0.0
      %689 = vmatprep.subr.mxu0 0.0
      %690 = vmatpush1.msra.mxu0 0.0
      %691 = vmatprep.subr.mxu0 0.0
      %692 = vmatpush1.msra.mxu0 0.0
      %693 = vmatprep.subr.mxu0 0.0
      %694 = vmatpush1.msra.mxu0 0.0
      %695 = vmatprep.subr.mxu0 0.0
      %696 = vmatpush1.msra.mxu0 0.0
      %697 = vmatprep.subr.mxu0 0.0
      %698 = vmatpush1.msra.mxu0 0.0
      %699 = vmatprep.subr.mxu0 0.0
      %700 = vmatpush1.msra.mxu0 0.0
      %701 = vmatprep.subr.mxu0 0.0
      %702 = vmatpush1.msra.mxu0 0.0
      %703 = vmatprep.subr.mxu0 0.0
      %704 = vmatpush1.msra.mxu0 0.0
      %705 = vmatprep.subr.mxu0 0.0
      %706 = vmatpush1.msra.mxu0 %v674
      %707 = vmatprep.subr.mxu0 0.0
      %708 = vmatpush1.msra.mxu0 %v673
      %709 = vmatprep.subr.mxu0 0.0
      %710 = vmatpush2.msra.mxu0 0.0
      %711 = vmatprep.subr.mxu0 0.0
      %712 = vmatpush2.msra.mxu0 0.0
      %713 = vmatprep.subr.mxu0 0.0
      %714 = vmatpush2.msra.mxu0 0.0
      %715 = vmatprep.subr.mxu0 0.0
      %716 = vmatpush2.msra.mxu0 0.0
      %717 = vmatprep.subr.mxu0 0.0
      %718 = vmatpush2.msra.mxu0 0.0
      %719 = vmatprep.subr.mxu0 0.0
      %720 = vmatpush2.msra.mxu0 0.0
      %721 = vmatprep.subr.mxu0 0.0
      %722 = vmatpush2.msra.mxu0 0.0
      %723 = vmatprep.subr.mxu0 0.0
      %724 = vmatpush2.msra.mxu0 0.0
      %725 = vmatprep.subr.mxu0 0.0
      %726 = vmatpush2.msra.mxu0 0.0
      %727 = vmatprep.subr.mxu0 0.0
      %728 = vmatpush2.msra.mxu0 0.0
      %729 = vmatprep.subr.mxu0 0.0
      %730 = vmatpush2.msra.mxu0 0.0
      %731 = vmatprep.subr.mxu0 0.0
      %732 = vmatpush2.msra.mxu0 0.0
      %733 = vmatprep.subr.mxu0 0.0
      %734 = vmatpush2.msra.mxu0 0.0
      %735 = vmatprep.subr.mxu0 0.0
      %736 = vmatpush2.msra.mxu0 0.0
      %737 = vmatprep.subr.mxu0 0.0
      %738 = vmatpush2.msra.mxu0 0.0
      %739 = vmatprep.subr.mxu0 0.0
      %740 = vmatpush2.msra.mxu0 0.0
      %741 = vmatprep.mubr.f32.mxu0 0.0
      %742 = vmatmul.mubr.f32.gmra.mxu0 %v234
      %v743 = vpop.f32.mrf.mxu0
      %v744 = vadd.f32 0.0, %v743
      %v745 = vpop.f32.mrf.mxu0
      %746 = vdwg.mxu0
      %747 = vmatprep.subr.mxu0 0.0
      %748 = vmatpush1.msra.mxu0 0.0
      %749 = vmatprep.subr.mxu0 0.0
      %750 = vmatpush1.msra.mxu0 0.0
      %751 = vmatprep.subr.mxu0 0.0
      %752 = vmatpush1.msra.mxu0 0.0
      %753 = vmatprep.subr.mxu0 0.0
      %754 = vmatpush1.msra.mxu0 0.0
      %755 = vmatprep.subr.mxu0 0.0
      %756 = vmatpush1.msra.mxu0 0.0
      %757 = vmatprep.subr.mxu0 0.0
      %758 = vmatpush1.msra.mxu0 0.0
      %759 = vmatprep.subr.mxu0 0.0
      %760 = vmatpush1.msra.mxu0 0.0
      %761 = vmatprep.subr.mxu0 0.0
      %762 = vmatpush1.msra.mxu0 0.0
      %763 = vmatprep.subr.mxu0 0.0
      %764 = vmatpush1.msra.mxu0 0.0
      %765 = vmatprep.subr.mxu0 0.0
      %766 = vmatpush1.msra.mxu0 0.0
      %767 = vmatprep.subr.mxu0 0.0
      %768 = vmatpush1.msra.mxu0 0.0
      %769 = vmatprep.subr.mxu0 0.0
      %770 = vmatpush1.msra.mxu0 0.0
      %771 = vmatprep.subr.mxu0 0.0
      %772 = vmatpush1.msra.mxu0 0.0
      %773 = vmatprep.subr.mxu0 0.0
      %774 = vmatpush1.msra.mxu0 0.0
      %775 = vmatprep.subr.mxu0 0.0
      %776 = vmatpush1.msra.mxu0 %v669
      %777 = vmatprep.subr.mxu0 0.0
      %778 = vmatpush1.msra.mxu0 %v668
      %779 = vmatprep.subr.mxu0 0.0
      %780 = vmatpush2.msra.mxu0 0.0
      %781 = vmatprep.subr.mxu0 0.0
      %782 = vmatpush2.msra.mxu0 0.0
      %783 = vmatprep.subr.mxu0 0.0
      %784 = vmatpush2.msra.mxu0 0.0
      %785 = vmatprep.subr.mxu0 0.0
      %786 = vmatpush2.msra.mxu0 0.0
      %787 = vmatprep.subr.mxu0 0.0
      %788 = vmatpush2.msra.mxu0 0.0
      %789 = vmatprep.subr.mxu0 0.0
      %790 = vmatpush2.msra.mxu0 0.0
      %791 = vmatprep.subr.mxu0 0.0
      %792 = vmatpush2.msra.mxu0 0.0
      %793 = vmatprep.subr.mxu0 0.0
      %794 = vmatpush2.msra.mxu0 0.0
      %795 = vmatprep.subr.mxu0 0.0
      %796 = vmatpush2.msra.mxu0 0.0
      %797 = vmatprep.subr.mxu0 0.0
      %798 = vmatpush2.msra.mxu0 0.0
      %799 = vmatprep.subr.mxu0 0.0
      %800 = vmatpush2.msra.mxu0 0.0
      %801 = vmatprep.subr.mxu0 0.0
      %802 = vmatpush2.msra.mxu0 0.0
      %803 = vmatprep.subr.mxu0 0.0
      %804 = vmatpush2.msra.mxu0 0.0
      %805 = vmatprep.subr.mxu0 0.0
      %806 = vmatpush2.msra.mxu0 0.0
      %807 = vmatprep.subr.mxu0 0.0
      %808 = vmatpush2.msra.mxu0 0.0
      %809 = vmatprep.subr.mxu0 0.0
      %810 = vmatpush2.msra.mxu0 0.0
      %811 = vmatprep.mubr.f32.mxu0 0.0
      %812 = vmatmul.mubr.f32.gmra.mxu0 %v234
      %v813 = vpop.f32.mrf.mxu0
      %v814 = vadd.f32 %v744, %v813
      %v815 = vpop.f32.mrf.mxu0
      %816 = vdwg.mxu0
      %817 = vmatprep.subr.mxu0 0.0
      %818 = vmatpush1.msra.mxu0 0.0
      %819 = vmatprep.subr.mxu0 0.0
      %820 = vmatpush1.msra.mxu0 0.0
      %821 = vmatprep.subr.mxu0 0.0
      %822 = vmatpush1.msra.mxu0 0.0
      %823 = vmatprep.subr.mxu0 0.0
      %824 = vmatpush1.msra.mxu0 0.0
      %825 = vmatprep.subr.mxu0 0.0
      %826 = vmatpush1.msra.mxu0 0.0
      %827 = vmatprep.subr.mxu0 0.0
      %828 = vmatpush1.msra.mxu0 0.0
      %829 = vmatprep.subr.mxu0 0.0
      %830 = vmatpush1.msra.mxu0 0.0
      %831 = vmatprep.subr.mxu0 0.0
      %832 = vmatpush1.msra.mxu0 0.0
      %833 = vmatprep.subr.mxu0 0.0
      %834 = vmatpush1.msra.mxu0 0.0
      %835 = vmatprep.subr.mxu0 0.0
      %836 = vmatpush1.msra.mxu0 0.0
      %837 = vmatprep.subr.mxu0 0.0
      %838 = vmatpush1.msra.mxu0 0.0
      %839 = vmatprep.subr.mxu0 0.0
      %840 = vmatpush1.msra.mxu0 0.0
      %841 = vmatprep.subr.mxu0 0.0
      %842 = vmatpush1.msra.mxu0 0.0
      %843 = vmatprep.subr.mxu0 0.0
      %844 = vmatpush1.msra.mxu0 0.0
      %845 = vmatprep.subr.mxu0 0.0
      %846 = vmatpush1.msra.mxu0 %v676
      %847 = vmatprep.subr.mxu0 0.0
      %848 = vmatpush1.msra.mxu0 %v675
      %849 = vmatprep.subr.mxu0 0.0
      %850 = vmatpush2.msra.mxu0 0.0
      %851 = vmatprep.subr.mxu0 0.0
      %852 = vmatpush2.msra.mxu0 0.0
      %853 = vmatprep.subr.mxu0 0.0
      %854 = vmatpush2.msra.mxu0 0.0
      %855 = vmatprep.subr.mxu0 0.0
      %856 = vmatpush2.msra.mxu0 0.0
      %857 = vmatprep.subr.mxu0 0.0
      %858 = vmatpush2.msra.mxu0 0.0
      %859 = vmatprep.subr.mxu0 0.0
      %860 = vmatpush2.msra.mxu0 0.0
      %861 = vmatprep.subr.mxu0 0.0
      %862 = vmatpush2.msra.mxu0 0.0
      %863 = vmatprep.subr.mxu0 0.0
      %864 = vmatpush2.msra.mxu0 0.0
      %865 = vmatprep.subr.mxu0 0.0
      %866 = vmatpush2.msra.mxu0 0.0
      %867 = vmatprep.subr.mxu0 0.0
      %868 = vmatpush2.msra.mxu0 0.0
      %869 = vmatprep.subr.mxu0 0.0
      %870 = vmatpush2.msra.mxu0 0.0
      %871 = vmatprep.subr.mxu0 0.0
      %872 = vmatpush2.msra.mxu0 0.0
      %873 = vmatprep.subr.mxu0 0.0
      %874 = vmatpush2.msra.mxu0 0.0
      %875 = vmatprep.subr.mxu0 0.0
      %876 = vmatpush2.msra.mxu0 0.0
      %877 = vmatprep.subr.mxu0 0.0
      %878 = vmatpush2.msra.mxu0 0.0
      %879 = vmatprep.subr.mxu0 0.0
      %880 = vmatpush2.msra.mxu0 0.0
      %881 = vmatprep.mubr.f32.mxu0 0.0
      %882 = vmatmul.mubr.f32.gmra.mxu0 %v234
      %v883 = vpop.f32.mrf.mxu0
      %v884 = vadd.f32 0.0, %v883
      %v885 = vpop.f32.mrf.mxu0
      %886 = vdwg.mxu0
      %v887 = vadd.f32 %v814, %v884
      %v888 = vld [vmem:[#allocation3] sm:$0xff]
      %v889 = vpack.c.bf16 %v887, %v887
      %v890 = vunpack.c.l.bf16 %v889
      %v891 = vsub.f32 %v887, %v890
      %v892 = vpack.c.bf16 %v891, %v891
      %v893 = vunpack.c.l.bf16 %v892
      %v894 = vsub.f32 %v891, %v893
      %895 = vmatprep.subr.mxu0 0.0
      %896 = vmatpush1.msra.mxu0 %v219
      %897 = vmatprep.subr.mxu0 0.0
      %898 = vmatpush1.msra.mxu0 %v218
      %899 = vmatprep.subr.mxu0 0.0
      %900 = vmatpush1.msra.mxu0 %v217
      %901 = vmatprep.subr.mxu0 0.0
      %902 = vmatpush1.msra.mxu0 %v216
      %903 = vmatprep.subr.mxu0 0.0
      %904 = vmatpush1.msra.mxu0 %v215
      %905 = vmatprep.subr.mxu0 0.0
      %906 = vmatpush1.msra.mxu0 %v214
      %907 = vmatprep.subr.mxu0 0.0
      %908 = vmatpush1.msra.mxu0 %v213
      %909 = vmatprep.subr.mxu0 0.0
      %910 = vmatpush1.msra.mxu0 %v212
      %911 = vmatprep.subr.mxu0 0.0
      %912 = vmatpush1.msra.mxu0 %v211
      %913 = vmatprep.subr.mxu0 0.0
      %914 = vmatpush1.msra.mxu0 %v210
      %915 = vmatprep.subr.mxu0 0.0
      %916 = vmatpush1.msra.mxu0 %v209
      %917 = vmatprep.subr.mxu0 0.0
      %918 = vmatpush1.msra.mxu0 %v208
      %919 = vmatprep.subr.mxu0 0.0
      %920 = vmatpush1.msra.mxu0 %v207
      %921 = vmatprep.subr.mxu0 0.0
      %922 = vmatpush1.msra.mxu0 %v206
      %923 = vmatprep.subr.mxu0 0.0
      %924 = vmatpush1.msra.mxu0 %v205
      %925 = vmatprep.subr.mxu0 0.0
      %926 = vmatpush1.msra.mxu0 %v204
      %927 = vmatprep.subr.mxu0 0.0
      %928 = vmatpush2.msra.mxu0 0.0
      %929 = vmatprep.subr.mxu0 0.0
      %930 = vmatpush2.msra.mxu0 0.0
      %931 = vmatprep.subr.mxu0 0.0
      %932 = vmatpush2.msra.mxu0 0.0
      %933 = vmatprep.subr.mxu0 0.0
      %934 = vmatpush2.msra.mxu0 0.0
      %935 = vmatprep.subr.mxu0 0.0
      %936 = vmatpush2.msra.mxu0 0.0
      %937 = vmatprep.subr.mxu0 0.0
      %938 = vmatpush2.msra.mxu0 0.0
      %939 = vmatprep.subr.mxu0 0.0
      %940 = vmatpush2.msra.mxu0 0.0
      %941 = vmatprep.subr.mxu0 0.0
      %942 = vmatpush2.msra.mxu0 0.0
      %943 = vmatprep.subr.mxu0 0.0
      %944 = vmatpush2.msra.mxu0 0.0
      %945 = vmatprep.subr.mxu0 0.0
      %946 = vmatpush2.msra.mxu0 0.0
      %947 = vmatprep.subr.mxu0 0.0
      %948 = vmatpush2.msra.mxu0 0.0
      %949 = vmatprep.subr.mxu0 0.0
      %950 = vmatpush2.msra.mxu0 0.0
      %951 = vmatprep.subr.mxu0 0.0
      %952 = vmatpush2.msra.mxu0 0.0
      %953 = vmatprep.subr.mxu0 0.0
      %954 = vmatpush2.msra.mxu0 0.0
      %955 = vmatprep.subr.mxu0 0.0
      %956 = vmatpush2.msra.mxu0 0.0
      %957 = vmatprep.subr.mxu0 0.0
      %958 = vmatpush2.msra.mxu0 0.0
      %959 = vmatprep.mubr.f32.mxu0 0.0
      %960 = vmatmul.mubr.f32.gmra.mxu0 %v893
      %v961 = vpop.f32.mrf.mxu0
      %v962 = vadd.f32 0.0, %v961
      %v963 = vpop.f32.mrf.mxu0
      %964 = vdwg.mxu0
      %965 = vmatprep.subr.mxu0 0.0
      %966 = vmatpush1.msra.mxu0 %v219
      %967 = vmatprep.subr.mxu0 0.0
      %968 = vmatpush1.msra.mxu0 %v218
      %969 = vmatprep.subr.mxu0 0.0
      %970 = vmatpush1.msra.mxu0 %v217
      %971 = vmatprep.subr.mxu0 0.0
      %972 = vmatpush1.msra.mxu0 %v216
      %973 = vmatprep.subr.mxu0 0.0
      %974 = vmatpush1.msra.mxu0 %v215
      %975 = vmatprep.subr.mxu0 0.0
      %976 = vmatpush1.msra.mxu0 %v214
      %977 = vmatprep.subr.mxu0 0.0
      %978 = vmatpush1.msra.mxu0 %v213
      %979 = vmatprep.subr.mxu0 0.0
      %980 = vmatpush1.msra.mxu0 %v212
      %981 = vmatprep.subr.mxu0 0.0
      %982 = vmatpush1.msra.mxu0 %v211
      %983 = vmatprep.subr.mxu0 0.0
      %984 = vmatpush1.msra.mxu0 %v210
      %985 = vmatprep.subr.mxu0 0.0
      %986 = vmatpush1.msra.mxu0 %v209
      %987 = vmatprep.subr.mxu0 0.0
      %988 = vmatpush1.msra.mxu0 %v208
      %989 = vmatprep.subr.mxu0 0.0
      %990 = vmatpush1.msra.mxu0 %v207
      %991 = vmatprep.subr.mxu0 0.0
      %992 = vmatpush1.msra.mxu0 %v206
      %993 = vmatprep.subr.mxu0 0.0
      %994 = vmatpush1.msra.mxu0 %v205
      %995 = vmatprep.subr.mxu0 0.0
      %996 = vmatpush1.msra.mxu0 %v204
      %997 = vmatprep.subr.mxu0 0.0
      %998 = vmatpush2.msra.mxu0 0.0
      %999 = vmatprep.subr.mxu0 0.0
      %1000 = vmatpush2.msra.mxu0 0.0
      %1001 = vmatprep.subr.mxu0 0.0
      %1002 = vmatpush2.msra.mxu0 0.0
      %1003 = vmatprep.subr.mxu0 0.0
      %1004 = vmatpush2.msra.mxu0 0.0
      %1005 = vmatprep.subr.mxu0 0.0
      %1006 = vmatpush2.msra.mxu0 0.0
      %1007 = vmatprep.subr.mxu0 0.0
      %1008 = vmatpush2.msra.mxu0 0.0
      %1009 = vmatprep.subr.mxu0 0.0
      %1010 = vmatpush2.msra.mxu0 0.0
      %1011 = vmatprep.subr.mxu0 0.0
      %1012 = vmatpush2.msra.mxu0 0.0
      %1013 = vmatprep.subr.mxu0 0.0
      %1014 = vmatpush2.msra.mxu0 0.0
      %1015 = vmatprep.subr.mxu0 0.0
      %1016 = vmatpush2.msra.mxu0 0.0
      %1017 = vmatprep.subr.mxu0 0.0
      %1018 = vmatpush2.msra.mxu0 0.0
      %1019 = vmatprep.subr.mxu0 0.0
      %1020 = vmatpush2.msra.mxu0 0.0
      %1021 = vmatprep.subr.mxu0 0.0
      %1022 = vmatpush2.msra.mxu0 0.0
      %1023 = vmatprep.subr.mxu0 0.0
      %1024 = vmatpush2.msra.mxu0 0.0
      %1025 = vmatprep.subr.mxu0 0.0
      %1026 = vmatpush2.msra.mxu0 0.0
      %1027 = vmatprep.subr.mxu0 0.0
      %1028 = vmatpush2.msra.mxu0 0.0
      %1029 = vmatprep.mubr.f32.mxu0 0.0
      %1030 = vmatmul.mubr.f32.gmra.mxu0 %v890
      %v1031 = vpop.f32.mrf.mxu0
      %v1032 = vadd.f32 %v962, %v1031
      %v1033 = vpop.f32.mrf.mxu0
      %1034 = vdwg.mxu0
      %1035 = vmatprep.subr.mxu0 0.0
      %1036 = vmatpush1.msra.mxu0 %v219
      %1037 = vmatprep.subr.mxu0 0.0
      %1038 = vmatpush1.msra.mxu0 %v218
      %1039 = vmatprep.subr.mxu0 0.0
      %1040 = vmatpush1.msra.mxu0 %v217
      %1041 = vmatprep.subr.mxu0 0.0
      %1042 = vmatpush1.msra.mxu0 %v216
      %1043 = vmatprep.subr.mxu0 0.0
      %1044 = vmatpush1.msra.mxu0 %v215
      %1045 = vmatprep.subr.mxu0 0.0
      %1046 = vmatpush1.msra.mxu0 %v214
      %1047 = vmatprep.subr.mxu0 0.0
      %1048 = vmatpush1.msra.mxu0 %v213
      %1049 = vmatprep.subr.mxu0 0.0
      %1050 = vmatpush1.msra.mxu0 %v212
      %1051 = vmatprep.subr.mxu0 0.0
      %1052 = vmatpush1.msra.mxu0 %v211
      %1053 = vmatprep.subr.mxu0 0.0
      %1054 = vmatpush1.msra.mxu0 %v210
      %1055 = vmatprep.subr.mxu0 0.0
      %1056 = vmatpush1.msra.mxu0 %v209
      %1057 = vmatprep.subr.mxu0 0.0
      %1058 = vmatpush1.msra.mxu0 %v208
      %1059 = vmatprep.subr.mxu0 0.0
      %1060 = vmatpush1.msra.mxu0 %v207
      %1061 = vmatprep.subr.mxu0 0.0
      %1062 = vmatpush1.msra.mxu0 %v206
      %1063 = vmatprep.subr.mxu0 0.0
      %1064 = vmatpush1.msra.mxu0 %v205
      %1065 = vmatprep.subr.mxu0 0.0
      %1066 = vmatpush1.msra.mxu0 %v204
      %1067 = vmatprep.subr.mxu0 0.0
      %1068 = vmatpush2.msra.mxu0 0.0
      %1069 = vmatprep.subr.mxu0 0.0
      %1070 = vmatpush2.msra.mxu0 0.0
      %1071 = vmatprep.subr.mxu0 0.0
      %1072 = vmatpush2.msra.mxu0 0.0
      %1073 = vmatprep.subr.mxu0 0.0
      %1074 = vmatpush2.msra.mxu0 0.0
      %1075 = vmatprep.subr.mxu0 0.0
      %1076 = vmatpush2.msra.mxu0 0.0
      %1077 = vmatprep.subr.mxu0 0.0
      %1078 = vmatpush2.msra.mxu0 0.0
      %1079 = vmatprep.subr.mxu0 0.0
      %1080 = vmatpush2.msra.mxu0 0.0
      %1081 = vmatprep.subr.mxu0 0.0
      %1082 = vmatpush2.msra.mxu0 0.0
      %1083 = vmatprep.subr.mxu0 0.0
      %1084 = vmatpush2.msra.mxu0 0.0
      %1085 = vmatprep.subr.mxu0 0.0
      %1086 = vmatpush2.msra.mxu0 0.0
      %1087 = vmatprep.subr.mxu0 0.0
      %1088 = vmatpush2.msra.mxu0 0.0
      %1089 = vmatprep.subr.mxu0 0.0
      %1090 = vmatpush2.msra.mxu0 0.0
      %1091 = vmatprep.subr.mxu0 0.0
      %1092 = vmatpush2.msra.mxu0 0.0
      %1093 = vmatprep.subr.mxu0 0.0
      %1094 = vmatpush2.msra.mxu0 0.0
      %1095 = vmatprep.subr.mxu0 0.0
      %1096 = vmatpush2.msra.mxu0 0.0
      %1097 = vmatprep.subr.mxu0 0.0
      %1098 = vmatpush2.msra.mxu0 0.0
      %1099 = vmatprep.mubr.f32.mxu0 0.0
      %1100 = vmatmul.mubr.f32.gmra.mxu0 %v894
      %v1101 = vpop.f32.mrf.mxu0
      %v1102 = vadd.f32 0.0, %v1101
      %v1103 = vpop.f32.mrf.mxu0
      %1104 = vdwg.mxu0
      %v1105 = vadd.f32 %v1032, %v1102
      %v1106 = vadd.f32 %v888, %v1105
      %1107 = vst [vmem:[#allocation3] sm:$0xff] %v1106
      %p1108 = scmp.eq.s32.totalorder %s19, 3
      // Predicated region
      $region37: #{dssim_loss.1} parent=31 // pred_check
        %p1109 = pneg %p1108
      $region38: #{dssim_loss.1} parent=31 // pred_check_branch
        %1111 = sbr.rel (%p1109) target = $region40
      $region39: #{dssim_loss.1} parent=31 // pred_region
        %v1112 = vld [vmem:[#allocation2] sm:$0xff]
        %v1113 = vld [vmem:[#allocation3] sm:$0xff]
        %v1114 = vmul.f32 %v1112, 0.015625
        %v1115 = vmul.f32 %v1114, 64.0
        %v1116 = vmul.f32 %v1115, %v1114
        %v1117 = vsub.f32 %v1113, %v1116
        %v1118 = vmul.f32 %v1117, 0.015873017
        %v1119 = vmul.f32 %v1113, 0.015625
        %v1120 = vmul.f32 %v1114, %v1114
        %v1121 = vsub.f32 %v1119, %v1120
        %v1122 = vmul.f32 %v1114, 2.0
        %v1123 = vmul.f32 %v1122, %v1114
        %v1124 = vadd.f32 %v1123, 0.0001
        %v1125 = vmul.f32 %v1121, 2.0
        %v1126 = vadd.f32 %v1125, 0.0009
        %v1127 = vmul.f32 %v1124, %v1126
        %v1128 = vadd.f32 %v1120, %v1120
        %v1129 = vadd.f32 %v1128, 0.0001
        %v1130 = vmul.f32 %v1118, %v1118
        %v1131 = vadd.f32 %v1130, %v1130
        %v1132 = vadd.f32 %v1131, 0.0009
        %v1133 = vmul.f32 %v1129, %v1132
        %v1134 = vrcp.pop %v1133
        %v1135 = vmul.f32 %v1127, %v1134
        %v1136 = vsub.f32 1.0, %v1135
        %v1137 = vmul.f32 %v1136, 0.5
        %1138 = vst [vmem:[%s194] sm:$0xff] %v1137
      $region40: #{dssim_loss.1} parent=31 // pred_fallthru
        _
      %p1139 = scmp.lt.s32.totalorder %s18, 1
      %s1140 = scalar_select %p1139, %s18, 1
      %s1141 = smul.addr %s1140, 8
      %s1142 = scalar_lea.vmem %s3, %s1141
      // Predicated region
      $region41: #{dssim_loss.1} parent=31 // pred_check
        %p1143 = pneg %p114
      $region42: #{dssim_loss.1} parent=31 // pred_check_branch
        %1145 = sbr.rel (%p1143) target = $region44
      $region43: #{dssim_loss.1} parent=31 // pred_region
        _
      $region44: #{dssim_loss.1} parent=31 // pred_fallthru
        _
    $region32: #{dssim_loss.1} parent=5 // pred_fallthru
      _
    %p1146 = scmp.le.s32.totalorder 2, %s9
    // Predicated region
    $region45: #{dssim_loss.1} parent=5 // pred_check
      %p1147 = pneg %p1146
    $region46: #{dssim_loss.1} parent=5 // pred_check_branch
      %1149 = sbr.rel (%p1147) target = $region48
    $region47: #{dssim_loss.1} parent=5 // pred_region
      %s1150 = ssub.s32 %s9, 2
      // Predicated region
      $region49: #{dssim_loss.1} parent=47 // pred_check
        %p1151 = pneg %p120
      $region50: #{dssim_loss.1} parent=47 // pred_check_branch
        %1153 = sbr.rel (%p1151) target = $region52
      $region51: #{dssim_loss.1} parent=47 // pred_region
        %p1154 = scmp.lt.s32.totalorder %s20, 1
        %s1155 = scalar_select %p1154, %s20, 1
        %s1156 = smul.addr %s1155, 8
        %s1157 = scalar_lea.vmem %s3, %s1156
      $region52: #{dssim_loss.1} parent=47 // pred_fallthru
        _
    $region48: #{dssim_loss.1} parent=5 // pred_fallthru
      _
  $region6: #{dssim_loss.1} parent=0 // loop_footer
    %s13 = sadd.s32 1, %s9
  $region7: #{dssim_loss.1} parent=0 // loop_footer_branch
    %8 = sbr.rel target = $region3
  $region8: #{dssim_loss.1} parent=0 // loop_exit
    _

</llo_original>
